<compile_context>
chip_gen: v7x
topology: tpu7x:2x2x1
jax: 0.10.0
libtpu: 0.0.40
codegen_flags: <defaults>
</compile_context>

<pallas_src>
import functools
import math

import jax
import jax.numpy as jnp
from jax.experimental import pallas as pl
from jax.experimental.pallas import tpu as pltpu


@functools.lru_cache(maxsize=None)
def _vmem_limit_bytes():
    """Scoped-VMEM limit: 64 MiB on 128 MiB parts (v5e/v6e), less on v7x (64 MiB VMEM)."""
    try:
        cap = int(pltpu.get_tpu_info().vmem_capacity_bytes)
    except Exception:
        cap = 128 * 1024 * 1024
    return min(64 * 1024 * 1024, (cap * 3) // 4)


def _seq_tile(seq_len, pref):
    """Sequence tile: `pref` when it divides S (no ragged Q/KV blocks), else full S."""
    return pref if seq_len % pref == 0 else seq_len


# ------------------------------------------------------------------ linear --
def _linear_kernel(x_ref, w_ref, b_ref, o_ref):
    # x: (tm, K)  w: (K, tn)  b: (1, tn)  -> o: (tm, tn); f32 MXU accumulation.
    y = jnp.dot(x_ref[...], w_ref[...], preferred_element_type=jnp.float32)
    y = y + b_ref[...].astype(jnp.float32)
    o_ref[...] = y.astype(o_ref.dtype)


def linear(x2d, w, b, *, tm=512, tn=512):
    """x2d: (M, K); w: (K, N) (stored (in, out)); b: (N,).  Returns (M, N)."""
    M, K = x2d.shape
    N = w.shape[1]
    # TODO(synk): for very large K (E >= 4096 in f32) add a K grid axis with an
    # f32 VMEM accumulator so the weight block fits v7x's 64 MiB VMEM.
    # Use the full dim when it fits in one tile (any size is allowed then);
    # otherwise a tile obeying the (8, 128) sublane/lane rules.  Ragged edges
    # are handled by the pl.cdiv grid (masked edge blocks) -- no jnp.pad copy.
    tm_eff = M if M <= tm else tm          # tm (512) is a multiple of 8
    tn_eff = N if N <= tn else tn          # tn (512) is a multiple of 128
    b2d = b.reshape(1, N)
    return pl.pallas_call(
        _linear_kernel,
        out_shape=jax.ShapeDtypeStruct((M, N), x2d.dtype),
        grid=(pl.cdiv(M, tm_eff), pl.cdiv(N, tn_eff)),
        in_specs=[
            pl.BlockSpec((tm_eff, K), lambda i, j: (i, 0)),   # activation rows
            pl.BlockSpec((K, tn_eff), lambda i, j: (0, j)),   # weight column block
            pl.BlockSpec((1, tn_eff), lambda i, j: (0, j)),   # bias column block
        ],
        out_specs=pl.BlockSpec((tm_eff, tn_eff), lambda i, j: (i, j)),
        compiler_params=pltpu.CompilerParams(
            dimension_semantics=("parallel", "parallel"),
            vmem_limit_bytes=_vmem_limit_bytes(),
        ),
    )(x2d, w, b2d)


# --------------------------------------------------------------- attention --
def _attn_kernel(q_ref, k_ref, v_ref, mask_ref, o_ref, m_sc, l_sc, acc_sc, *,
                 scale, heads, head_dim):
    """Flash-style online-softmax step for one (batch, q_tile, kv_tile) grid point.

    q_ref: (tq, E)  k_ref/v_ref: (tkv, E)  mask_ref: (1, tkv)  o_ref: (tq, E)
    Scratch (persists across the kv axis): m_sc/l_sc (tq, H) f32, acc_sc (tq, E) f32.
    """
    kv = pl.program_id(2)

    @pl.when(kv == 0)
    def _():
        m_sc[...] = jnp.full_like(m_sc, -jnp.inf)
        l_sc[...] = jnp.zeros_like(l_sc)
        acc_sc[...] = jnp.zeros_like(acc_sc)

    kmask = mask_ref[...]                       # (1, tkv) int32 key-padding mask
    q = q_ref[...] * scale                      # fold 1/sqrt(d) into Q (O(tq*E))
    k = k_ref[...]
    v = v_ref[...]

    for h in range(heads):                      # static, unrolled loop over heads
        hs = slice(h * head_dim, (h + 1) * head_dim)
        # energy_h = Q_h K_h^T: contract the head dim directly (no transpose op).
        s = jax.lax.dot_general(q[:, hs], k[:, hs], (((1,), (1,)), ((), ())),
                                preferred_element_type=jnp.float32)
        s = jnp.where(kmask == 0, -1e10, s)     # matches masked_fill(-1e10) (f32)
        m_prev = m_sc[:, h:h + 1]
        m_new = jnp.maximum(m_prev, jnp.max(s, axis=-1, keepdims=True))
        alpha = jnp.exp(m_prev - m_new)
        p = jnp.exp(s - m_new)
        l_sc[:, h:h + 1] = alpha * l_sc[:, h:h + 1] + jnp.sum(p, axis=-1, keepdims=True)
        acc_sc[:, hs] = alpha * acc_sc[:, hs] + jnp.dot(
            p.astype(v.dtype), v[:, hs], preferred_element_type=jnp.float32)
        m_sc[:, h:h + 1] = m_new

    # TODO(synk): attention dropout omitted -- module is evaluated in eval mode,
    # where F.dropout is the identity.

    @pl.when(kv == pl.num_programs(2) - 1)
    def _():
        # Exact reciprocal for f32 outputs; approximate (EUP slot) for bf16.
        approx = o_ref.dtype != jnp.float32
        for h in range(heads):
            hs = slice(h * head_dim, (h + 1) * head_dim)
            inv = pl.reciprocal(l_sc[:, h:h + 1], approx=approx)
            o_ref[:, hs] = (acc_sc[:, hs] * inv).astype(o_ref.dtype)


def _attention(q_arr, k_arr, v_arr, cols, mask3, *, heads, head_dim, scale,
               tq_pref=128, tkv_pref=128):
    """q/k/v_arr: (B, S, C) where each projection occupies columns
    [col*E, (col+1)*E) of the last dim (C = 3E for the fused QKV slab, E
    otherwise).  mask3: (B, 1, S) int32.  Returns the context in (B, S, E)."""
    B, S, _ = q_arr.shape
    E = heads * head_dim
    tq = _seq_tile(S, tq_pref)
    tkv = _seq_tile(S, tkv_pref)
    q_col, k_col, v_col = cols

    kernel = functools.partial(_attn_kernel, scale=scale, heads=heads,
                               head_dim=head_dim)
    return pl.pallas_call(
        kernel,
        out_shape=jax.ShapeDtypeStruct((B, S, E), q_arr.dtype),
        grid=(B, S // tq, S // tkv),
        in_specs=[
            pl.BlockSpec((None, tq, E), lambda b, qi, ki: (b, qi, q_col)),
            pl.BlockSpec((None, tkv, E), lambda b, qi, ki: (b, ki, k_col)),
            pl.BlockSpec((None, tkv, E), lambda b, qi, ki: (b, ki, v_col)),
            pl.BlockSpec((None, 1, tkv), lambda b, qi, ki: (b, 0, ki)),
        ],
        out_specs=pl.BlockSpec((None, tq, E), lambda b, qi, ki: (b, qi, 0)),
        scratch_shapes=[
            pltpu.VMEM((tq, heads), jnp.float32),   # running max per head
            pltpu.VMEM((tq, heads), jnp.float32),   # running softmax sum per head
            pltpu.VMEM((tq, E), jnp.float32),       # f32 context accumulator
        ],
        compiler_params=pltpu.CompilerParams(
            dimension_semantics=("parallel", "parallel", "arbitrary"),
            vmem_limit_bytes=_vmem_limit_bytes(),
        ),
    )(q_arr, k_arr, v_arr, mask3)


# ------------------------------------------------------------------- model --
def multi_headed_attention(query, key, value, params, *, heads, mask=None,
                           tm=512, tq=128, tkv=128):
    """query/key/value: (B, S, E); mask: (B, S) key-padding mask or None."""
    B, S, E = query.shape
    assert E % heads == 0
    d = E // heads
    wq, bq, wk, bk, wv, bv, wo, bo = params

    self_attn = (query is key) and (query is value)
    if self_attn:
        # Fused QKV: one (E, 3E) projection; the activation is read from HBM
        # once and the attention kernel indexes columns 0/1/2 of the resulting
        # (B, S, 3E) slab, so no slicing or transposes ever touch HBM.
        w_qkv = jnp.concatenate([wq, wk, wv], axis=1)        # (E, 3E)
        b_qkv = jnp.concatenate([bq, bk, bv], axis=0)        # (3E,)
        qkv = linear(query.reshape(B * S, E), w_qkv, b_qkv, tm=tm)
        qkv = qkv.reshape(B, S, 3 * E)
        q_arr = k_arr = v_arr = qkv
        cols = (0, 1, 2)
    else:
        # Cross attention: inputs differ, so each activation is projected once
        # (there is no redundant HBM read to fuse away).
        q_arr = linear(query.reshape(B * S, E), wq, bq, tm=tm).reshape(B, S, E)
        k_arr = linear(key.reshape(B * S, E), wk, bk, tm=tm).reshape(B, S, E)
        v_arr = linear(value.reshape(B * S, E), wv, bv, tm=tm).reshape(B, S, E)
        cols = (0, 0, 0)

    # mask (B, S) interpreted as a key-padding mask, broadcast over heads/queries.
    if mask is None:
        mask3 = jnp.ones((B, 1, S), dtype=jnp.int32)
    else:
        mask3 = mask.reshape(B, 1, S).astype(jnp.int32)

    ctx = _attention(q_arr, k_arr, v_arr, cols, mask3, heads=heads, head_dim=d,
                     scale=1.0 / math.sqrt(d), tq_pref=tq, tkv_pref=tkv)  # (B,S,E)

    out = linear(ctx.reshape(B * S, E), wo, bo, tm=tm)
    return out.reshape(B, S, E)


def init_params(key, embed_dim, dtype=jnp.float32):
    """nn.Linear-style init for the 4 projections; weights stored (in, out)."""
    ks = jax.random.split(key, 8)
    bound = 1.0 / math.sqrt(embed_dim)

    def lin(kw, kb):
        w = jax.random.uniform(kw, (embed_dim, embed_dim), dtype, -bound, bound)
        b = jax.random.uniform(kb, (embed_dim,), dtype, -bound, bound)
        return w, b

    wq, bq = lin(ks[0], ks[1])
    wk, bk = lin(ks[2], ks[3])
    wv, bv = lin(ks[4], ks[5])
    wo, bo = lin(ks[6], ks[7])
    return (wq, bq, wk, bk, wv, bv, wo, bo)


def ref_mha(query, key, value, params, heads, mask=None):
    """Pure-JAX reference mirroring the PyTorch module (eval mode)."""
    B, S, E = query.shape
    d = E // heads
    wq, bq, wk, bk, wv, bv, wo, bo = params
    Q = (query @ wq + bq).reshape(B, S, heads, d).transpose(0, 2, 1, 3)
    K = (key @ wk + bk).reshape(B, S, heads, d).transpose(0, 2, 1, 3)
    V = (value @ wv + bv).reshape(B, S, heads, d).transpose(0, 2, 1, 3)
    energy = jnp.einsum("bhqd,bhkd->bhqk", Q, K) / math.sqrt(d)
    if mask is not None:
        energy = jnp.where(mask[:, None, None, :] == 0, -1e10, energy)
    attn = jax.nn.softmax(energy, axis=-1)
    x = jnp.einsum("bhqk,bhkd->bhqd", attn, V)
    x = x.transpose(0, 2, 1, 3).reshape(B, S, E)
    return x @ wo + bo


if __name__ == "__main__":
    batch, sent_len, embed_dim, heads = 2, 8, 128, 4
    root = jax.random.PRNGKey(0)
    kx, kk, kv, kp = jax.random.split(root, 4)

    x = jax.random.normal(kx, (batch, sent_len, embed_dim), dtype=jnp.float32)
    key_in = jax.random.normal(kk, (batch, sent_len, embed_dim), dtype=jnp.float32)
    val_in = jax.random.normal(kv, (batch, sent_len, embed_dim), dtype=jnp.float32)
    params = init_params(kp, embed_dim)

    # key-padding mask: mask out the last two key positions of batch element 1
    mask = jnp.ones((batch, sent_len), dtype=jnp.int32)
    mask = mask.at[1, -2:].set(0)

    # 1) self-attention (query is key is value) -> fused QKV path, f32, tight check
    out = multi_headed_attention(x, x, x, params, heads=heads, mask=mask)
    out = jax.block_until_ready(out)
    ref = ref_mha(x, x, x, params, heads, mask=mask)
    assert out.shape == (batch, sent_len, embed_dim)
    err = float(jnp.max(jnp.abs(out - ref)))
    assert jnp.allclose(out, ref, atol=1e-4, rtol=1e-4), err

    # 2) cross-attention (distinct key/value inputs) -> separate projection path
    out_x = multi_headed_attention(x, key_in, val_in, params, heads=heads, mask=mask)
    out_x = jax.block_until_ready(out_x)
    ref_x = ref_mha(x, key_in, val_in, params, heads, mask=mask)
    err_x = float(jnp.max(jnp.abs(out_x - ref_x)))
    assert jnp.allclose(out_x, ref_x, atol=1e-4, rtol=1e-4), err_x

    # 3) bf16 operands (matmuls run bf16 on the MXU; accumulation / softmax
    #    stats stay f32 inside the kernels) -> loose smoke check vs f32 reference
    x_bf = x.astype(jnp.bfloat16)
    params_bf = tuple(p.astype(jnp.bfloat16) for p in params)
    out_bf = multi_headed_attention(x_bf, x_bf, x_bf, params_bf, heads=heads, mask=mask)
    out_bf = jax.block_until_ready(out_bf)
    err_bf = float(jnp.max(jnp.abs(out_bf.astype(jnp.float32) - ref)))
    assert err_bf < 0.15, err_bf

    print("KERNEL_OK")
</pallas_src>

<mosaic_0001>
module attributes {stable_mosaic.version = 11 : i64} {
  func.func @_linear_kernel(%arg0: i32, %arg1: i32, %arg2: memref<16x128xf32, #tpu.memory_space<vmem>>, %arg3: memref<128x384xf32, #tpu.memory_space<vmem>>, %arg4: memref<1x384xf32, #tpu.memory_space<vmem>>, %arg5: memref<16x384xf32, #tpu.memory_space<vmem>>) attributes {dimension_semantics = [#tpu.dimension_semantics<parallel>, #tpu.dimension_semantics<parallel>], iteration_bounds = array<i64: 1, 1>, scalar_prefetch = 0 : i64, scratch_operands = 0 : i64, tpu.core_type = #tpu.core_type<tc>, window_params = [{transform_indices = @transform_0, window_bounds = array<i64: 16, 128>}, {transform_indices = @transform_1, window_bounds = array<i64: 128, 384>}, {transform_indices = @transform_2, window_bounds = array<i64: 1, 384>}, {transform_indices = @transform_3, window_bounds = array<i64: 16, 384>}]} {
    %c0 = arith.constant 0 : index
    %c0_0 = arith.constant 0 : index
    %0 = vector.load %arg2[%c0, %c0_0] : memref<16x128xf32, #tpu.memory_space<vmem>>, vector<16x128xf32>
    %c0_1 = arith.constant 0 : index
    %c0_2 = arith.constant 0 : index
    %1 = vector.load %arg3[%c0_1, %c0_2] : memref<128x384xf32, #tpu.memory_space<vmem>>, vector<128x384xf32>
    %cst = arith.constant dense<0.000000e+00> : vector<16x384xf32>
    %2 = tpu.matmul %0, %1, %cst {dimension_numbers = #tpu.dot_dimension_numbers<[1], [0], [0], [1], [0, 0, 1, 1], [], []>} : vector<16x128xf32>, vector<128x384xf32>, vector<16x384xf32> -> vector<16x384xf32>
    %c0_3 = arith.constant 0 : index
    %c0_4 = arith.constant 0 : index
    %3 = vector.load %arg4[%c0_3, %c0_4] : memref<1x384xf32, #tpu.memory_space<vmem>>, vector<1x384xf32>
    %4 = vector.broadcast %3 : vector<1x384xf32> to vector<16x384xf32>
    %5 = arith.addf %2, %4 : vector<16x384xf32>
    %c0_5 = arith.constant 0 : index
    %c0_6 = arith.constant 0 : index
    %6 = vector.load %arg5[%c0_5, %c0_6] : memref<16x384xf32, #tpu.memory_space<vmem>>, vector<16x384xf32>
    tpu.vector_store %arg5[%c0_5, %c0_6], %5 {strides = array<i32>} : memref<16x384xf32, #tpu.memory_space<vmem>>, vector<16x384xf32>,
    return
  }
  func.func @transform_0(%arg0: i32, %arg1: i32) -> (i32, i32) {
    %c0_i32 = arith.constant 0 : i32
    %c0_i32_0 = arith.constant 0 : i32
    return %arg0, %c0_i32 : i32, i32
  }
  func.func @transform_1(%arg0: i32, %arg1: i32) -> (i32, i32) {
    %c0_i32 = arith.constant 0 : i32
    %c0_i32_0 = arith.constant 0 : i32
    return %c0_i32, %arg1 : i32, i32
  }
  func.func @transform_2(%arg0: i32, %arg1: i32) -> (i32, i32) {
    %c0_i32 = arith.constant 0 : i32
    %c0_i32_0 = arith.constant 0 : i32
    return %c0_i32, %arg1 : i32, i32
  }
  func.func @transform_3(%arg0: i32, %arg1: i32) -> (i32, i32) {
    %c0_i32 = arith.constant 0 : i32
    return %arg0, %arg1 : i32, i32
  }
}

</mosaic_0001>

<llo_original>
// kernel: tpu_custom_call.1
$region0: #{tpu_custom_call.1}
  #allocation0 [shape = 'u32[]', space=smem, size = 0x4, offset = 0x4, fixed_abs, tag = 'smem constant byte address 0x4 - core index']
  #allocation1 [shape = 'u32[144,128]{1,0:T(1,128)}', space=vmem, size = 0x12000, scoped, tag = 'internal scratch']
  %s0 = inlined_call_operand.hbm [shape: f32[16,128], index: 0, kind: input, shape index: {}]
  %s1 = inlined_call_operand.hbm [shape: f32[128,384], index: 1, kind: input, shape index: {}]
  %s2 = inlined_call_operand.hbm [shape: f32[1,384], index: 2, kind: input, shape index: {}]
  %s3 = inlined_call_operand.hbm [shape: f32[16,384], index: 3, kind: output, shape index: {}]
  %s4 = sld [smem:[#allocation0]]
  $region34: #{tpu_custom_call.1} parent=0
    _
  %s6 = ssub.s32 1, %s4
  %s7 = scalar_select 0, %s6, %s4
  $region1: #{tpu_custom_call.1} parent=0
    #allocation2 [shape = 'u8[8192]{0}', space=vmem, size = 0x2000, scoped, tag = 'input window, operand 0, single buffered']
    #allocation3 [shape = 's32[1]{0}', space=sflag, size = 0x4, scoped, tag = 'scoped memory for tpu_custom_call.1']
    #allocation4 [shape = 's32[1]{0}', space=sflag, size = 0x4, scoped, tag = 'scoped memory for tpu_custom_call.1']
    #allocation5 [shape = 'u8[196608]{0}', space=vmem, size = 0x30000, scoped, tag = 'input window, operand 1, single buffered']
    #allocation6 [shape = 's32[1]{0}', space=sflag, size = 0x4, scoped, tag = 'scoped memory for tpu_custom_call.1']
    #allocation7 [shape = 'u8[1536]{0}', space=vmem, size = 0x800, scoped, tag = 'input window, operand 2, single buffered']
    #allocation8 [shape = 'u8[24576]{0}', space=vmem, size = 0x6000, scoped, tag = 'output window, operand 0, single buffered']
    %8 = vsyncpa [#allocation3], 0
    %9 = vsyncpa [#allocation6], 0
    %10 = vsyncpa [#allocation4], 0
    // Predicated region
    $region2: #{tpu_custom_call.1} parent=1 // pred_check
      _
    $region3: #{tpu_custom_call.1} parent=1 // pred_check_branch
      %12 = sbr.rel (0) target = $region5
    $region4: #{tpu_custom_call.1} parent=1 // pred_region
      %s14 = ssub.s32 256, 256
      %15 = vsyncadd [#allocation3], %s14
      %s16 = sshll.u32 [#allocation2], 4
      %s17 = int_to_ptr.vmem [resolvable:$true] %s16
      %22 = dma.hbm_to_vmem [thread:$0]  %s0, 256, %s17, [#allocation3], 128, 128, 8
    $region5: #{tpu_custom_call.1} parent=1 // pred_fallthru
      _
    // Predicated region
    $region6: #{tpu_custom_call.1} parent=1 // pred_check
      _
    $region7: #{tpu_custom_call.1} parent=1 // pred_check_branch
      %24 = sbr.rel (0) target = $region9
    $region8: #{tpu_custom_call.1} parent=1 // pred_region
      %s26 = ssub.s32 6144, 6144
      %27 = vsyncadd [#allocation6], %s26
      %s28 = sshll.u32 [#allocation5], 4
      %s29 = int_to_ptr.vmem [resolvable:$true] %s28
      %34 = dma.hbm_to_vmem [thread:$0]  %s1, 6144, %s29, [#allocation6], 384, 384, 24
    $region9: #{tpu_custom_call.1} parent=1 // pred_fallthru
      _
    // Predicated region
    $region10: #{tpu_custom_call.1} parent=1 // pred_check
      _
    $region11: #{tpu_custom_call.1} parent=1 // pred_check_branch
      %36 = sbr.rel (0) target = $region13
    $region12: #{tpu_custom_call.1} parent=1 // pred_region
      %s38 = ssub.s32 48, 48
      %39 = vsyncadd [#allocation6], %s38
      %s41 = sshll.u32 [#allocation7], 4
      %s42 = int_to_ptr.vmem [resolvable:$true] %s41
      %44 = dma.hbm_to_vmem [thread:$0]  %s2, 48, %s42, [#allocation6]
    $region13: #{tpu_custom_call.1} parent=1 // pred_fallthru
      _
    // Predicated region
    $region14: #{tpu_custom_call.1} parent=1 // pred_check
      _
    $region15: #{tpu_custom_call.1} parent=1 // pred_check_branch
      %46 = sbr.rel (0) target = $region17
    $region16: #{tpu_custom_call.1} parent=1 // pred_region
      %47 = dma.done [#allocation3], 256
    $region17: #{tpu_custom_call.1} parent=1 // pred_fallthru
      _
    // Predicated region
    $region18: #{tpu_custom_call.1} parent=1 // pred_check
      _
    $region19: #{tpu_custom_call.1} parent=1 // pred_check_branch
      %49 = sbr.rel (0) target = $region21
    $region20: #{tpu_custom_call.1} parent=1 // pred_region
      %50 = dma.done [#allocation6], 6144
    $region21: #{tpu_custom_call.1} parent=1 // pred_fallthru
      _
    // Predicated region
    $region22: #{tpu_custom_call.1} parent=1 // pred_check
      _
    $region23: #{tpu_custom_call.1} parent=1 // pred_check_branch
      %52 = sbr.rel (0) target = $region25
    $region24: #{tpu_custom_call.1} parent=1 // pred_region
      %53 = dma.done [#allocation6], 48
    $region25: #{tpu_custom_call.1} parent=1 // pred_fallthru
      _
    %v54 = vld [vmem:[#allocation2] sm:$0xff]
    %v55 = vld [vmem:[#allocation2 + $0x8] sm:$0xff]
    %v56 = vld [vmem:[#allocation5] sm:$0xff]
    %v57 = vld [vmem:[#allocation5 + $0x8] sm:$0xff]
    %v58 = vld [vmem:[#allocation5 + $0x10] sm:$0xff]
    %v59 = vld [vmem:[#allocation5 + $0x18] sm:$0xff]
    %v60 = vld [vmem:[#allocation5 + $0x20] sm:$0xff]
    %v61 = vld [vmem:[#allocation5 + $0x28] sm:$0xff]
    %v62 = vld [vmem:[#allocation5 + $0x30] sm:$0xff]
    %v63 = vld [vmem:[#allocation5 + $0x38] sm:$0xff]
    %v64 = vld [vmem:[#allocation5 + $0x40] sm:$0xff]
    %v65 = vld [vmem:[#allocation5 + $0x48] sm:$0xff]
    %v66 = vld [vmem:[#allocation5 + $0x50] sm:$0xff]
    %v67 = vld [vmem:[#allocation5 + $0x58] sm:$0xff]
    %v68 = vld [vmem:[#allocation5 + $0x60] sm:$0xff]
    %v69 = vld [vmem:[#allocation5 + $0x68] sm:$0xff]
    %v70 = vld [vmem:[#allocation5 + $0x70] sm:$0xff]
    %v71 = vld [vmem:[#allocation5 + $0x78] sm:$0xff]
    %v72 = vld [vmem:[#allocation5 + $0x80] sm:$0xff]
    %v73 = vld [vmem:[#allocation5 + $0x88] sm:$0xff]
    %v74 = vld [vmem:[#allocation5 + $0x90] sm:$0xff]
    %v75 = vld [vmem:[#allocation5 + $0x98] sm:$0xff]
    %v76 = vld [vmem:[#allocation5 + $0xa0] sm:$0xff]
    %v77 = vld [vmem:[#allocation5 + $0xa8] sm:$0xff]
    %v78 = vld [vmem:[#allocation5 + $0xb0] sm:$0xff]
    %v79 = vld [vmem:[#allocation5 + $0xb8] sm:$0xff]
    %v80 = vld [vmem:[#allocation5 + $0xc0] sm:$0xff]
    %v81 = vld [vmem:[#allocation5 + $0xc8] sm:$0xff]
    %v82 = vld [vmem:[#allocation5 + $0xd0] sm:$0xff]
    %v83 = vld [vmem:[#allocation5 + $0xd8] sm:$0xff]
    %v84 = vld [vmem:[#allocation5 + $0xe0] sm:$0xff]
    %v85 = vld [vmem:[#allocation5 + $0xe8] sm:$0xff]
    %v86 = vld [vmem:[#allocation5 + $0xf0] sm:$0xff]
    %v87 = vld [vmem:[#allocation5 + $0xf8] sm:$0xff]
    %v88 = vld [vmem:[#allocation5 + $0x100] sm:$0xff]
    %v89 = vld [vmem:[#allocation5 + $0x108] sm:$0xff]
    %v90 = vld [vmem:[#allocation5 + $0x110] sm:$0xff]
    %v91 = vld [vmem:[#allocation5 + $0x118] sm:$0xff]
    %v92 = vld [vmem:[#allocation5 + $0x120] sm:$0xff]
    %v93 = vld [vmem:[#allocation5 + $0x128] sm:$0xff]
    %v94 = vld [vmem:[#allocation5 + $0x130] sm:$0xff]
    %v95 = vld [vmem:[#allocation5 + $0x138] sm:$0xff]
    %v96 = vld [vmem:[#allocation5 + $0x140] sm:$0xff]
    %v97 = vld [vmem:[#allocation5 + $0x148] sm:$0xff]
    %v98 = vld [vmem:[#allocation5 + $0x150] sm:$0xff]
    %v99 = vld [vmem:[#allocation5 + $0x158] sm:$0xff]
    %v100 = vld [vmem:[#allocation5 + $0x160] sm:$0xff]
    %v101 = vld [vmem:[#allocation5 + $0x168] sm:$0xff]
    %v102 = vld [vmem:[#allocation5 + $0x170] sm:$0xff]
    %v103 = vld [vmem:[#allocation5 + $0x178] sm:$0xff]
    %v104 = vld [vmem:[#allocation7] sm:$0x7]
    %v106 = vlaneseq
    %v107 = vshrl.u32 %v106, 7
    %v108 = vsub.s32 0, %v107
    %v109 = vrot.slane %v104, %v108
    %v110 = vlaneseq
    %v111 = vshrl.u32 %v110, 7
    %v112 = vsub.s32 1, %v111
    %v113 = vrot.slane %v104, %v112
    %v114 = vlaneseq
    %v115 = vshrl.u32 %v114, 7
    %v116 = vsub.s32 2, %v115
    %v117 = vrot.slane %v104, %v116
    %121 = vmatprep.subr.mxu0 %v57
    %122 = vmatpush1.msra.mxu0 %v56
    %123 = vmatprep.subr.mxu0 %v60
    %124 = vmatpush1.msra.mxu0 %v59
    %125 = vmatprep.subr.mxu0 %v63
    %126 = vmatpush1.msra.mxu0 %v62
    %127 = vmatprep.subr.mxu0 %v66
    %128 = vmatpush1.msra.mxu0 %v65
    %129 = vmatprep.subr.mxu0 %v69
    %130 = vmatpush1.msra.mxu0 %v68
    %131 = vmatprep.subr.mxu0 %v72
    %132 = vmatpush1.msra.mxu0 %v71
    %133 = vmatprep.subr.mxu0 %v75
    %134 = vmatpush1.msra.mxu0 %v74
    %135 = vmatprep.subr.mxu0 %v78
    %136 = vmatpush1.msra.mxu0 %v77
    %137 = vmatprep.subr.mxu0 %v81
    %138 = vmatpush1.msra.mxu0 %v80
    %139 = vmatprep.subr.mxu0 %v84
    %140 = vmatpush1.msra.mxu0 %v83
    %141 = vmatprep.subr.mxu0 %v87
    %142 = vmatpush1.msra.mxu0 %v86
    %143 = vmatprep.subr.mxu0 %v90
    %144 = vmatpush1.msra.mxu0 %v89
    %145 = vmatprep.subr.mxu0 %v93
    %146 = vmatpush1.msra.mxu0 %v92
    %147 = vmatprep.subr.mxu0 %v96
    %148 = vmatpush1.msra.mxu0 %v95
    %149 = vmatprep.subr.mxu0 %v99
    %150 = vmatpush1.msra.mxu0 %v98
    %151 = vmatprep.subr.mxu0 %v102
    %152 = vmatpush1.msra.mxu0 %v101
    %153 = vmatprep.subr.mxu0 0.0
    %154 = vmatpush1.msra.mxu0 0.0
    %155 = vmatprep.subr.mxu0 0.0
    %156 = vmatpush1.msra.mxu0 0.0
    %157 = vmatprep.subr.mxu0 0.0
    %158 = vmatpush1.msra.mxu0 0.0
    %159 = vmatprep.subr.mxu0 0.0
    %160 = vmatpush1.msra.mxu0 0.0
    %161 = vmatprep.subr.mxu0 0.0
    %162 = vmatpush1.msra.mxu0 0.0
    %163 = vmatprep.subr.mxu0 0.0
    %164 = vmatpush1.msra.mxu0 0.0
    %165 = vmatprep.subr.mxu0 0.0
    %166 = vmatpush1.msra.mxu0 0.0
    %167 = vmatprep.subr.mxu0 0.0
    %168 = vmatpush1.msra.mxu0 0.0
    %169 = vmatprep.subr.mxu0 0.0
    %170 = vmatpush1.msra.mxu0 0.0
    %171 = vmatprep.subr.mxu0 0.0
    %172 = vmatpush1.msra.mxu0 0.0
    %173 = vmatprep.subr.mxu0 0.0
    %174 = vmatpush1.msra.mxu0 0.0
    %175 = vmatprep.subr.mxu0 0.0
    %176 = vmatpush1.msra.mxu0 0.0
    %177 = vmatprep.subr.mxu0 0.0
    %178 = vmatpush1.msra.mxu0 0.0
    %179 = vmatprep.subr.mxu0 0.0
    %180 = vmatpush1.msra.mxu0 0.0
    %181 = vmatprep.subr.mxu0 0.0
    %182 = vmatpush1.msra.mxu0 0.0
    %183 = vmatprep.subr.mxu0 0.0
    %184 = vmatpush1.msra.mxu0 0.0
    %185 = vmatprep.mubr.f32.mxu0 0.0
    %186 = vmatmul.mubr.f32.gmra.mrb[0].mxu0 %v54
    %v187 = vpop.f32.mrb[0].mxu0
    %v188 = vadd.f32 %v109, %v187
    %v189 = vpop.f32.mrb[0].mxu0
    %v190 = vadd.f32 %v113, %v189
    %191 = vmatprep.mubr.f32.mxu0 0.0
    %192 = vmatmul.mubr.f32.gmra.mrb[0].mxu0 %v55
    %v193 = vpop.f32.mrb[0].mxu0
    %v194 = vadd.f32 %v109, %v193
    %v195 = vpop.f32.mrb[0].mxu0
    %v196 = vadd.f32 %v113, %v195
    %197 = vdwg.mxu0
    %198 = vmatprep.subr.mxu0 0.0
    %199 = vmatpush1.msra.mxu0 %v58
    %200 = vmatprep.subr.mxu0 0.0
    %201 = vmatpush1.msra.mxu0 %v61
    %202 = vmatprep.subr.mxu0 0.0
    %203 = vmatpush1.msra.mxu0 %v64
    %204 = vmatprep.subr.mxu0 0.0
    %205 = vmatpush1.msra.mxu0 %v67
    %206 = vmatprep.subr.mxu0 0.0
    %207 = vmatpush1.msra.mxu0 %v70
    %208 = vmatprep.subr.mxu0 0.0
    %209 = vmatpush1.msra.mxu0 %v73
    %210 = vmatprep.subr.mxu0 0.0
    %211 = vmatpush1.msra.mxu0 %v76
    %212 = vmatprep.subr.mxu0 0.0
    %213 = vmatpush1.msra.mxu0 %v79
    %214 = vmatprep.subr.mxu0 0.0
    %215 = vmatpush1.msra.mxu0 %v82
    %216 = vmatprep.subr.mxu0 0.0
    %217 = vmatpush1.msra.mxu0 %v85
    %218 = vmatprep.subr.mxu0 0.0
    %219 = vmatpush1.msra.mxu0 %v88
    %220 = vmatprep.subr.mxu0 0.0
    %221 = vmatpush1.msra.mxu0 %v91
    %222 = vmatprep.subr.mxu0 0.0
    %223 = vmatpush1.msra.mxu0 %v94
    %224 = vmatprep.subr.mxu0 0.0
    %225 = vmatpush1.msra.mxu0 %v97
    %226 = vmatprep.subr.mxu0 0.0
    %227 = vmatpush1.msra.mxu0 %v100
    %228 = vmatprep.subr.mxu0 0.0
    %229 = vmatpush1.msra.mxu0 %v103
    %230 = vmatprep.subr.mxu0 0.0
    %231 = vmatpush1.msra.mxu0 0.0
    %232 = vmatprep.subr.mxu0 0.0
    %233 = vmatpush1.msra.mxu0 0.0
    %234 = vmatprep.subr.mxu0 0.0
    %235 = vmatpush1.msra.mxu0 0.0
    %236 = vmatprep.subr.mxu0 0.0
    %237 = vmatpush1.msra.mxu0 0.0
    %238 = vmatprep.subr.mxu0 0.0
    %239 = vmatpush1.msra.mxu0 0.0
    %240 = vmatprep.subr.mxu0 0.0
    %241 = vmatpush1.msra.mxu0 0.0
    %242 = vmatprep.subr.mxu0 0.0
    %243 = vmatpush1.msra.mxu0 0.0
    %244 = vmatprep.subr.mxu0 0.0
    %245 = vmatpush1.msra.mxu0 0.0
    %246 = vmatprep.subr.mxu0 0.0
    %247 = vmatpush1.msra.mxu0 0.0
    %248 = vmatprep.subr.mxu0 0.0
    %249 = vmatpush1.msra.mxu0 0.0
    %250 = vmatprep.subr.mxu0 0.0
    %251 = vmatpush1.msra.mxu0 0.0
    %252 = vmatprep.subr.mxu0 0.0
    %253 = vmatpush1.msra.mxu0 0.0
    %254 = vmatprep.subr.mxu0 0.0
    %255 = vmatpush1.msra.mxu0 0.0
    %256 = vmatprep.subr.mxu0 0.0
    %257 = vmatpush1.msra.mxu0 0.0
    %258 = vmatprep.subr.mxu0 0.0
    %259 = vmatpush1.msra.mxu0 0.0
    %260 = vmatprep.subr.mxu0 0.0
    %261 = vmatpush1.msra.mxu0 0.0
    %262 = vmatprep.mubr.f32.mxu0 0.0
    %263 = vmatmul.mubr.f32.gmra.mrb[0].mxu0 %v54
    %v264 = vpop.f32.mrb[0].mxu0
    %v265 = vadd.f32 %v117, %v264
    %v266 = vpop.f32.mrb[0].mxu0
    %267 = vmatprep.mubr.f32.mxu0 0.0
    %268 = vmatmul.mubr.f32.gmra.mrb[0].mxu0 %v55
    %v269 = vpop.f32.mrb[0].mxu0
    %v270 = vadd.f32 %v117, %v269
    %v271 = vpop.f32.mrb[0].mxu0
    %272 = vdwg.mxu0
    %273 = vst [vmem:[#allocation8] sm:$0xff] %v188
    %274 = vst [vmem:[#allocation8 + $0x8] sm:$0xff] %v190
    %275 = vst [vmem:[#allocation8 + $0x10] sm:$0xff] %v265
    %276 = vst [vmem:[#allocation8 + $0x18] sm:$0xff] %v194
    %277 = vst [vmem:[#allocation8 + $0x20] sm:$0xff] %v196
    %278 = vst [vmem:[#allocation8 + $0x28] sm:$0xff] %v270
    // Predicated region
    $region26: #{tpu_custom_call.1} parent=1 // pred_check
      _
    $region27: #{tpu_custom_call.1} parent=1 // pred_check_branch
      %280 = sbr.rel (0) target = $region29
    $region28: #{tpu_custom_call.1} parent=1 // pred_region
      %s282 = ssub.s32 768, 768
      %283 = vsyncadd [#allocation4], %s282
      %s284 = sshll.u32 [#allocation8], 4
      %s285 = int_to_ptr.vmem [resolvable:$true] %s284
      %290 = dma.vmem_to_hbm [thread:$0]  %s285, 768, %s3, [#allocation4], 384, 384, 24
    $region29: #{tpu_custom_call.1} parent=1 // pred_fallthru
      _
    // Predicated region
    $region30: #{tpu_custom_call.1} parent=1 // pred_check
      _
    $region31: #{tpu_custom_call.1} parent=1 // pred_check_branch
      %292 = sbr.rel (0) target = $region33
    $region32: #{tpu_custom_call.1} parent=1 // pred_region
      %293 = dma.done [#allocation4], 768
    $region33: #{tpu_custom_call.1} parent=1 // pred_fallthru
      _
    %294 = vsyncpa [#allocation3], 1
    %295 = vsyncpa [#allocation6], 1
    %296 = vsyncpa [#allocation4], 1

</llo_original>
